<compile_context>
chip_gen: v5e
topology: v5e:2x2
jax: 0.10.0
libtpu: 0.0.40
codegen_flags: <defaults>
</compile_context>

<pallas_src>
import functools

import numpy as np

import jax
import jax.numpy as jnp
from jax.experimental import pallas as pl
from jax.experimental.pallas import tpu as pltpu


def construct_magic_rescale_const(time_length_to_use):
    return 400.0 / (750.0 - 500.0 + time_length_to_use)


MAGIC_LOSS_RESCALE_CONST2 = construct_magic_rescale_const(500.0)


# ----------------------------------------------------------------------------
# Fused Pallas kernel: spatial filters + time upsample + depthwise conv1d
#                      + precomputed gensig + Poisson loss + mask + sum
# ----------------------------------------------------------------------------
def _fused_forward_kernel(jit_ref, filt_ref, hist_ref, mix_ref, tfilt_ref,
                          precomp_ref, spikes_ref, mask_ref, out_ref, *, magic):
    # Per grid step (one batch element b), cells-on-sublanes / time-on-lanes:
    #   jit_ref:     (1, NJ, P)     bf16  jittered frames, flattened pixels
    #   filt_ref:    (C, P)         bf16  stacked flat spatial filters (shared)
    #   hist_ref:    (1, NH, C)     f32   precomputed history frames
    #   mix_ref:     (1, NF, T)     f32   forward-overlap upsample mixing matrix
    #   tfilt_ref:   (C, NBF)       f32   stacked timecourse filters (shared)
    #   precomp_ref: (1, C, Tout)   f32   precomputed feedback+coupling gensig
    #   spikes_ref:  (1, C, T)      f32   observed spikes
    #   mask_ref:    (1, 1, Tloss)  f32   time mask
    #   out_ref:     (1, 1, 1)      f32   per-batch masked loss sum
    jit_b = jit_ref[0]                      # (NJ, P) bf16
    filt = filt_ref[...]                    # (C, P)  bf16

    # Spatial filter application on the MXU (bf16 in, f32 accumulate) -> (C, NJ)
    spat = jax.lax.dot_general(
        filt, jit_b, dimension_numbers=(((1,), (1,)), ((), ())),
        preferred_element_type=jnp.float32)

    hist = hist_ref[0]                      # (NH, C) f32
    mix = mix_ref[0]                        # (NF, T) f32
    n_hist = hist.shape[0]

    # TimeUpsampleTransposeFlat forward as two matmuls with the precomputed
    # mixing matrix -> upsampled movie (C, T), time on lanes.
    up = jax.lax.dot_general(
        hist, mix[:n_hist, :], dimension_numbers=(((0,), (0,)), ((), ())),
        preferred_element_type=jnp.float32)
    up = up + jax.lax.dot_general(
        spat, mix[n_hist:, :], dimension_numbers=(((1,), (0,)), ((), ())),
        preferred_element_type=jnp.float32)

    # Depthwise (groups=n_cells) conv1d over time + precomputed fb/coupling.
    tfilt = tfilt_ref[...]                  # (C, NBF)
    nbf = tfilt.shape[1]
    acc = precomp_ref[0]                    # (C, Tout)
    t_out = acc.shape[1]
    for k in range(nbf):                    # NBF small -> static unroll
        acc = acc + up[:, k:k + t_out] * tfilt[:, k:k + 1]

    # Poisson noreduce negative log-likelihood, masked, rescaled, summed.
    g = acc[:, :t_out - 1]                  # gen_sig[:, :, :-1]       (C, Tloss)
    s = spikes_ref[0][:, nbf:]              # spikes[:, :, NBF:]       (C, Tloss)
    loss = jnp.exp(g) - s * g               # f32 elementwise (VPU/EUP)
    masked = loss * mask_ref[0]             # (1, Tloss) broadcast over cells
    out_ref[0] = jnp.sum(masked, keepdims=True) * magic     # (1, 1)


def fused_forward(jit_flat_bf16, filt_bf16, hist, mix, tfilt, precomp,
                  spikes, mask3, magic):
    B, NJ, P = jit_flat_bf16.shape
    C = filt_bf16.shape[0]
    NH = hist.shape[1]
    NF, T = mix.shape[1], mix.shape[2]
    NBF = tfilt.shape[1]
    Tout = precomp.shape[2]
    Tloss = mask3.shape[2]
    out = pl.pallas_call(
        functools.partial(_fused_forward_kernel, magic=magic),
        out_shape=jax.ShapeDtypeStruct((B, 1, 1), jnp.float32),
        grid=(B,),
        in_specs=[
            pl.BlockSpec((1, NJ, P), lambda b: (b, 0, 0)),
            pl.BlockSpec((C, P), lambda b: (0, 0)),
            pl.BlockSpec((1, NH, C), lambda b: (b, 0, 0)),
            pl.BlockSpec((1, NF, T), lambda b: (b, 0, 0)),
            pl.BlockSpec((C, NBF), lambda b: (0, 0)),
            pl.BlockSpec((1, C, Tout), lambda b: (b, 0, 0)),
            pl.BlockSpec((1, C, T), lambda b: (b, 0, 0)),
            pl.BlockSpec((1, 1, Tloss), lambda b: (b, 0, 0)),
        ],
        out_specs=pl.BlockSpec((1, 1, 1), lambda b: (b, 0, 0)),
        compiler_params=pltpu.CompilerParams(
            dimension_semantics=("parallel",)),
    )(jit_flat_bf16, filt_bf16, hist, mix, tfilt, precomp, spikes, mask3)
    return out[:, 0, 0]


# ----------------------------------------------------------------------------
# Plain-JAX glue
# ----------------------------------------------------------------------------
def jitter_frames(batched_image, eye_movements):
    """JitterFrame forward: integer pixel shift with zero padding.
    jittered[b, f, y, x] = image[b, y - dy, x - dx] if in-bounds else 0,
    with (dy, dx) = eye_movements[b, f]."""
    B, H, W = batched_image.shape
    dy = eye_movements[:, :, 0]
    dx = eye_movements[:, :, 1]
    src_y = jnp.arange(H)[None, None, :] - dy[:, :, None]      # (B, NJ, H)
    src_x = jnp.arange(W)[None, None, :] - dx[:, :, None]      # (B, NJ, W)
    valid = (((src_y >= 0) & (src_y < H))[:, :, :, None]
             & ((src_x >= 0) & (src_x < W))[:, :, None, :])
    sy = jnp.clip(src_y, 0, H - 1)
    sx = jnp.clip(src_x, 0, W - 1)
    b_idx = jnp.arange(B)[:, None, None, None]
    gathered = batched_image[b_idx, sy[:, :, :, None], sx[:, :, None, :]]
    return jnp.where(valid, gathered, 0.0)


def known_eye_movement_image_loss_forward(
        batched_image, batched_spikes, eye_movements, time_mask,
        spat_filters_flat, timecourse_filters,
        precomp_history_frames, precomp_fb_coupling_gensig,
        forward_mixing_matrix, magic):
    B, H, W = batched_image.shape
    n_pixels = H * W

    jit = jitter_frames(batched_image, eye_movements)          # (B, NJ, H, W)
    jit_flat = jit.reshape(B, -1, n_pixels).astype(jnp.bfloat16)
    filt_bf16 = spat_filters_flat.astype(jnp.bfloat16)
    mask3 = time_mask[:, None, :]                               # (B, 1, Tloss)

    return fused_forward(jit_flat, filt_bf16, precomp_history_frames,
                         forward_mixing_matrix, timecourse_filters,
                         precomp_fb_coupling_gensig, batched_spikes,
                         mask3, magic)


# ----------------------------------------------------------------------------
# Constructor-time glue (numpy)
# ----------------------------------------------------------------------------
def batch_compute_forward_interval_overlaps(frame_transition_times, spike_bin_edges):
    """Forward-direction interval overlaps (frame -> spike-bin), at most 2
    overlapping frames per spike bin (numpy, constructor-time glue)."""
    B = spike_bin_edges.shape[0]
    T = spike_bin_edges.shape[1] - 1
    NF = frame_transition_times.shape[1] - 1
    sel = np.zeros((B, T, 2), dtype=np.int32)
    wts = np.zeros((B, T, 2), dtype=np.float32)
    for b in range(B):
        ft = frame_transition_times[b]
        for t in range(T):
            lo, hi = spike_bin_edges[b, t], spike_bin_edges[b, t + 1]
            k0 = int(np.searchsorted(ft, lo, side='right')) - 1
            k0 = max(0, min(k0, NF - 1))
            k1 = min(k0 + 1, NF - 1)
            total = hi - lo
            ov0 = max(0.0, min(hi, ft[k0 + 1]) - max(lo, ft[k0]))
            ov1 = 0.0
            if k1 != k0:
                ov1 = max(0.0, min(hi, ft[k1 + 1]) - max(lo, ft[k1]))
            sel[b, t] = (k0, k1)
            wts[b, t] = (ov0 / total, ov1 / total)
    return sel, wts


def build_forward_mixing_matrix(fwd_sel, fwd_w, n_frames):
    """Constructor-time (B, NF, T) mixing matrix so the upsample is one matmul."""
    B, T, _ = fwd_sel.shape
    mix = np.zeros((B, n_frames, T), dtype=np.float32)
    for b in range(B):
        for t in range(T):
            for j in range(2):
                mix[b, fwd_sel[b, t, j], t] += fwd_w[b, t, j]
    return mix


# ----------------------------------------------------------------------------
# Pure-JAX f32 reference (same semantics) for a correctness check
# ----------------------------------------------------------------------------
def reference_forward(batched_image, batched_spikes, eye_movements, time_mask,
                      spat_filters_flat, timecourse_filters,
                      precomp_history_frames, precomp_fb_coupling_gensig,
                      fwd_sel, fwd_w, magic):
    B, H, W = batched_image.shape
    C, NBF = timecourse_filters.shape
    jit = jitter_frames(batched_image, eye_movements)
    jit_flat = jit.reshape(B, -1, H * W)
    jit_spat = jnp.einsum('cp,bfp->bfc', spat_filters_flat, jit_flat)
    frames_all = jnp.concatenate([precomp_history_frames, jit_spat], axis=1)
    g0 = jnp.take_along_axis(frames_all, fwd_sel[:, :, 0:1], axis=1)
    g1 = jnp.take_along_axis(frames_all, fwd_sel[:, :, 1:2], axis=1)
    up = fwd_w[:, :, 0:1] * g0 + fwd_w[:, :, 1:2] * g1         # (B, T, C)
    T = up.shape[1]
    Tout = T - NBF + 1
    conv = jnp.zeros((B, Tout, C), jnp.float32)
    for k in range(NBF):
        conv = conv + up[:, k:k + Tout, :] * timecourse_filters[:, k][None, None, :]
    gen_sig = conv + jnp.transpose(precomp_fb_coupling_gensig, (0, 2, 1))
    g = gen_sig[:, :-1, :]
    s = jnp.transpose(batched_spikes[:, :, NBF:], (0, 2, 1))
    loss = jnp.exp(g) - s * g
    masked = loss * time_mask[:, :, None]
    return jnp.sum(masked, axis=(1, 2)) * magic


# ----------------------------------------------------------------------------
if __name__ == "__main__":
    B = 2
    H = W = 8
    P = H * W
    C = 16          # n_cells
    NBF = 8         # n_bins_filter
    NH = 4          # n_history_frames
    NJ = 8          # n_jittered_frames
    NF = NH + NJ    # total frames feeding the upsampler

    frame_len = 5.5
    frame_transition_times = np.tile(np.arange(NF + 1) * frame_len, (B, 1))
    T = int(round(frame_transition_times[0, -1]))               # n_bins_total = 66
    spike_bin_edges = np.tile(np.arange(T + 1, dtype=np.float64), (B, 1))
    Tout = T - NBF + 1
    Tloss = T - NBF

    fwd_sel_np, fwd_w_np = batch_compute_forward_interval_overlaps(
        frame_transition_times, spike_bin_edges)
    fwd_sel = jnp.asarray(fwd_sel_np, jnp.int32)
    fwd_w = jnp.asarray(fwd_w_np, jnp.float32)
    mix_matrix = jnp.asarray(
        build_forward_mixing_matrix(fwd_sel_np, fwd_w_np, NF), jnp.float32)

    keys = jax.random.split(jax.random.PRNGKey(0), 8)
    spat_filters_flat = jax.random.normal(keys[0], (C, P), jnp.float32) * 0.05
    timecourse_filters = jax.random.normal(keys[1], (C, NBF), jnp.float32) * 0.2
    precomp_history_frames = jax.random.normal(keys[2], (B, NH, C), jnp.float32) * 0.1
    precomp_fb_coupling_gensig = jax.random.normal(keys[3], (B, C, Tout), jnp.float32) * 0.1

    batched_image = jax.random.normal(keys[4], (B, H, W), jnp.float32)
    batched_spikes = jax.random.bernoulli(keys[5], 0.3, (B, C, T)).astype(jnp.float32)
    eye_movements = jax.random.randint(keys[6], (B, NJ, 2), -2, 3, jnp.int32)
    time_mask = jax.random.bernoulli(keys[7], 0.9, (B, Tloss)).astype(jnp.float32)

    out = known_eye_movement_image_loss_forward(
        batched_image, batched_spikes, eye_movements, time_mask,
        spat_filters_flat, timecourse_filters,
        precomp_history_frames, precomp_fb_coupling_gensig,
        mix_matrix, MAGIC_LOSS_RESCALE_CONST2)
    out = jax.block_until_ready(out)

    ref = reference_forward(
        batched_image, batched_spikes, eye_movements, time_mask,
        spat_filters_flat, timecourse_filters,
        precomp_history_frames, precomp_fb_coupling_gensig,
        fwd_sel, fwd_w, MAGIC_LOSS_RESCALE_CONST2)
    ref = jax.block_until_ready(ref)

    assert out.shape == (B,), out.shape
    np.testing.assert_allclose(np.asarray(out), np.asarray(ref),
                               rtol=1e-2, atol=1e-3)
    print("KERNEL_OK")
</pallas_src>

<mosaic_0001>
module attributes {stable_mosaic.version = 11 : i64} {
  func.func @_fused_forward_kernel(%arg0: i32, %arg1: memref<1x8x64xbf16, #tpu.memory_space<vmem>>, %arg2: memref<16x64xbf16, #tpu.memory_space<vmem>>, %arg3: memref<1x4x16xf32, #tpu.memory_space<vmem>>, %arg4: memref<1x12x66xf32, #tpu.memory_space<vmem>>, %arg5: memref<16x8xf32, #tpu.memory_space<vmem>>, %arg6: memref<1x16x59xf32, #tpu.memory_space<vmem>>, %arg7: memref<1x16x66xf32, #tpu.memory_space<vmem>>, %arg8: memref<1x1x58xf32, #tpu.memory_space<vmem>>, %arg9: memref<1x1x1xf32, #tpu.memory_space<vmem>>) attributes {dimension_semantics = [#tpu.dimension_semantics<parallel>], iteration_bounds = array<i64: 2>, scalar_prefetch = 0 : i64, scratch_operands = 0 : i64, tpu.core_type = #tpu.core_type<tc>, window_params = [{transform_indices = @transform_0, window_bounds = array<i64: 1, 8, 64>}, {pipeline_mode = #tpu.pipeline_mode<synchronous>, transform_indices = @transform_1, window_bounds = array<i64: 16, 64>}, {transform_indices = @transform_2, window_bounds = array<i64: 1, 4, 16>}, {transform_indices = @transform_3, window_bounds = array<i64: 1, 12, 66>}, {pipeline_mode = #tpu.pipeline_mode<synchronous>, transform_indices = @transform_4, window_bounds = array<i64: 16, 8>}, {transform_indices = @transform_5, window_bounds = array<i64: 1, 16, 59>}, {transform_indices = @transform_6, window_bounds = array<i64: 1, 16, 66>}, {transform_indices = @transform_7, window_bounds = array<i64: 1, 1, 58>}, {transform_indices = @transform_8, window_bounds = array<i64: 1, 1, 1>}]} {
    %c0 = arith.constant 0 : index
    %c0_0 = arith.constant 0 : index
    %c0_1 = arith.constant 0 : index
    %0 = vector.load %arg1[%c0, %c0_0, %c0_1] : memref<1x8x64xbf16, #tpu.memory_space<vmem>>, vector<1x8x64xbf16>
    %1 = vector.shape_cast %0 : vector<1x8x64xbf16> to vector<8x64xbf16>
    %c0_2 = arith.constant 0 : index
    %c0_3 = arith.constant 0 : index
    %2 = vector.load %arg2[%c0_2, %c0_3] : memref<16x64xbf16, #tpu.memory_space<vmem>>, vector<16x64xbf16>
    %cst = arith.constant dense<0.000000e+00> : vector<16x8xf32>
    %3 = tpu.matmul %2, %1, %cst {dimension_numbers = #tpu.dot_dimension_numbers<[1], [1], [0], [0], [0, 0, 1, 0], [], []>} : vector<16x64xbf16>, vector<8x64xbf16>, vector<16x8xf32> -> vector<16x8xf32>
    %c0_4 = arith.constant 0 : index
    %c0_5 = arith.constant 0 : index
    %c0_6 = arith.constant 0 : index
    %4 = vector.load %arg3[%c0_4, %c0_5, %c0_6] : memref<1x4x16xf32, #tpu.memory_space<vmem>>, vector<1x4x16xf32>
    %5 = vector.shape_cast %4 : vector<1x4x16xf32> to vector<4x16xf32>
    %c0_7 = arith.constant 0 : index
    %c0_8 = arith.constant 0 : index
    %c0_9 = arith.constant 0 : index
    %6 = vector.load %arg4[%c0_7, %c0_8, %c0_9] : memref<1x12x66xf32, #tpu.memory_space<vmem>>, vector<1x12x66xf32>
    %7 = vector.shape_cast %6 : vector<1x12x66xf32> to vector<12x66xf32>
    %8 = vector.extract_strided_slice %7 {offsets = [0, 0], sizes = [4, 66], strides = [1, 1]} : vector<12x66xf32> to vector<4x66xf32>
    %cst_10 = arith.constant dense<0.000000e+00> : vector<16x66xf32>
    %9 = tpu.matmul %5, %8, %cst_10 {dimension_numbers = #tpu.dot_dimension_numbers<[0], [0], [1], [1], [0, 1, 1, 1], [], []>} : vector<4x16xf32>, vector<4x66xf32>, vector<16x66xf32> -> vector<16x66xf32>
    %10 = vector.extract_strided_slice %7 {offsets = [4, 0], sizes = [8, 66], strides = [1, 1]} : vector<12x66xf32> to vector<8x66xf32>
    %cst_11 = arith.constant dense<0.000000e+00> : vector<16x66xf32>
    %11 = tpu.matmul %3, %10, %cst_11 {dimension_numbers = #tpu.dot_dimension_numbers<[1], [0], [0], [1], [0, 0, 1, 1], [], []>} : vector<16x8xf32>, vector<8x66xf32>, vector<16x66xf32> -> vector<16x66xf32>
    %12 = arith.addf %9, %11 : vector<16x66xf32>
    %c0_12 = arith.constant 0 : index
    %c0_13 = arith.constant 0 : index
    %13 = vector.load %arg5[%c0_12, %c0_13] : memref<16x8xf32, #tpu.memory_space<vmem>>, vector<16x8xf32>
    %c0_14 = arith.constant 0 : index
    %c0_15 = arith.constant 0 : index
    %c0_16 = arith.constant 0 : index
    %14 = vector.load %arg6[%c0_14, %c0_15, %c0_16] : memref<1x16x59xf32, #tpu.memory_space<vmem>>, vector<1x16x59xf32>
    %15 = vector.shape_cast %14 : vector<1x16x59xf32> to vector<16x59xf32>
    %16 = vector.extract_strided_slice %12 {offsets = [0, 0], sizes = [16, 59], strides = [1, 1]} : vector<16x66xf32> to vector<16x59xf32>
    %17 = vector.extract_strided_slice %13 {offsets = [0, 0], sizes = [16, 1], strides = [1, 1]} : vector<16x8xf32> to vector<16x1xf32>
    %18 = vector.broadcast %17 : vector<16x1xf32> to vector<16x59xf32>
    %19 = arith.mulf %16, %18 : vector<16x59xf32>
    %20 = arith.addf %15, %19 : vector<16x59xf32>
    %21 = vector.extract_strided_slice %12 {offsets = [0, 1], sizes = [16, 59], strides = [1, 1]} : vector<16x66xf32> to vector<16x59xf32>
    %22 = vector.extract_strided_slice %13 {offsets = [0, 1], sizes = [16, 1], strides = [1, 1]} : vector<16x8xf32> to vector<16x1xf32>
    %23 = vector.broadcast %22 : vector<16x1xf32> to vector<16x59xf32>
    %24 = arith.mulf %21, %23 : vector<16x59xf32>
    %25 = arith.addf %20, %24 : vector<16x59xf32>
    %26 = vector.extract_strided_slice %12 {offsets = [0, 2], sizes = [16, 59], strides = [1, 1]} : vector<16x66xf32> to vector<16x59xf32>
    %27 = vector.extract_strided_slice %13 {offsets = [0, 2], sizes = [16, 1], strides = [1, 1]} : vector<16x8xf32> to vector<16x1xf32>
    %28 = vector.broadcast %27 : vector<16x1xf32> to vector<16x59xf32>
    %29 = arith.mulf %26, %28 : vector<16x59xf32>
    %30 = arith.addf %25, %29 : vector<16x59xf32>
    %31 = vector.extract_strided_slice %12 {offsets = [0, 3], sizes = [16, 59], strides = [1, 1]} : vector<16x66xf32> to vector<16x59xf32>
    %32 = vector.extract_strided_slice %13 {offsets = [0, 3], sizes = [16, 1], strides = [1, 1]} : vector<16x8xf32> to vector<16x1xf32>
    %33 = vector.broadcast %32 : vector<16x1xf32> to vector<16x59xf32>
    %34 = arith.mulf %31, %33 : vector<16x59xf32>
    %35 = arith.addf %30, %34 : vector<16x59xf32>
    %36 = vector.extract_strided_slice %12 {offsets = [0, 4], sizes = [16, 59], strides = [1, 1]} : vector<16x66xf32> to vector<16x59xf32>
    %37 = vector.extract_strided_slice %13 {offsets = [0, 4], sizes = [16, 1], strides = [1, 1]} : vector<16x8xf32> to vector<16x1xf32>
    %38 = vector.broadcast %37 : vector<16x1xf32> to vector<16x59xf32>
    %39 = arith.mulf %36, %38 : vector<16x59xf32>
    %40 = arith.addf %35, %39 : vector<16x59xf32>
    %41 = vector.extract_strided_slice %12 {offsets = [0, 5], sizes = [16, 59], strides = [1, 1]} : vector<16x66xf32> to vector<16x59xf32>
    %42 = vector.extract_strided_slice %13 {offsets = [0, 5], sizes = [16, 1], strides = [1, 1]} : vector<16x8xf32> to vector<16x1xf32>
    %43 = vector.broadcast %42 : vector<16x1xf32> to vector<16x59xf32>
    %44 = arith.mulf %41, %43 : vector<16x59xf32>
    %45 = arith.addf %40, %44 : vector<16x59xf32>
    %46 = vector.extract_strided_slice %12 {offsets = [0, 6], sizes = [16, 59], strides = [1, 1]} : vector<16x66xf32> to vector<16x59xf32>
    %47 = vector.extract_strided_slice %13 {offsets = [0, 6], sizes = [16, 1], strides = [1, 1]} : vector<16x8xf32> to vector<16x1xf32>
    %48 = vector.broadcast %47 : vector<16x1xf32> to vector<16x59xf32>
    %49 = arith.mulf %46, %48 : vector<16x59xf32>
    %50 = arith.addf %45, %49 : vector<16x59xf32>
    %51 = vector.extract_strided_slice %12 {offsets = [0, 7], sizes = [16, 59], strides = [1, 1]} : vector<16x66xf32> to vector<16x59xf32>
    %52 = vector.extract_strided_slice %13 {offsets = [0, 7], sizes = [16, 1], strides = [1, 1]} : vector<16x8xf32> to vector<16x1xf32>
    %53 = vector.broadcast %52 : vector<16x1xf32> to vector<16x59xf32>
    %54 = arith.mulf %51, %53 : vector<16x59xf32>
    %55 = arith.addf %50, %54 : vector<16x59xf32>
    %56 = vector.extract_strided_slice %55 {offsets = [0, 0], sizes = [16, 58], strides = [1, 1]} : vector<16x59xf32> to vector<16x58xf32>
    %c0_17 = arith.constant 0 : index
    %c0_18 = arith.constant 0 : index
    %c0_19 = arith.constant 0 : index
    %57 = vector.load %arg7[%c0_17, %c0_18, %c0_19] : memref<1x16x66xf32, #tpu.memory_space<vmem>>, vector<1x16x66xf32>
    %58 = vector.shape_cast %57 : vector<1x16x66xf32> to vector<16x66xf32>
    %59 = vector.extract_strided_slice %58 {offsets = [0, 8], sizes = [16, 58], strides = [1, 1]} : vector<16x66xf32> to vector<16x58xf32>
    %60 = math.exp %56 : vector<16x58xf32>
    %61 = arith.mulf %59, %56 : vector<16x58xf32>
    %62 = arith.subf %60, %61 : vector<16x58xf32>
    %c0_20 = arith.constant 0 : index
    %c0_21 = arith.constant 0 : index
    %c0_22 = arith.constant 0 : index
    %63 = vector.load %arg8[%c0_20, %c0_21, %c0_22] : memref<1x1x58xf32, #tpu.memory_space<vmem>>, vector<1x1x58xf32>
    %64 = vector.shape_cast %63 : vector<1x1x58xf32> to vector<1x58xf32>
    %65 = vector.broadcast %64 : vector<1x58xf32> to vector<16x58xf32>
    %66 = arith.mulf %62, %65 : vector<16x58xf32>
    %67 = vector.shape_cast %66 : vector<16x58xf32> to vector<1x16x58xf32>
    %cst_23 = arith.constant dense<0.000000e+00> : vector<1xf32>
    %68 = vector.multi_reduction <add>, %67, %cst_23 [1, 2] : vector<1x16x58xf32> to vector<1xf32>
    %69 = vector.shape_cast %68 : vector<1xf32> to vector<1x1x1xf32>
    %70 = vector.extract %69[0, 0, 0] : f32 from vector<1x1x1xf32>
    %71 = vector.broadcast %70 : f32 to vector<1x1xf32>
    %cst_24 = arith.constant 0.533333361 : f32
    %72 = vector.broadcast %cst_24 : f32 to vector<1x1xf32>
    %73 = arith.mulf %71, %72 : vector<1x1xf32>
    %c0_25 = arith.constant 0 : index
    %c0_26 = arith.constant 0 : index
    %c0_27 = arith.constant 0 : index
    %74 = vector.load %arg9[%c0_25, %c0_26, %c0_27] : memref<1x1x1xf32, #tpu.memory_space<vmem>>, vector<1x1x1xf32>
    %75 = vector.shape_cast %74 : vector<1x1x1xf32> to vector<1x1xf32>
    %76 = vector.shape_cast %73 : vector<1x1xf32> to vector<1x1x1xf32>
    tpu.vector_store %arg9[%c0_25, %c0_26, %c0_27], %76 {strides = array<i32>} : memref<1x1x1xf32, #tpu.memory_space<vmem>>, vector<1x1x1xf32>,
    return
  }
  func.func @transform_0(%arg0: i32) -> (i32, i32, i32) {
    %c0_i32 = arith.constant 0 : i32
    %c0_i32_0 = arith.constant 0 : i32
    %c0_i32_1 = arith.constant 0 : i32
    return %arg0, %c0_i32, %c0_i32_0 : i32, i32, i32
  }
  func.func @transform_1(%arg0: i32) -> (i32, i32) {
    %c0_i32 = arith.constant 0 : i32
    %c0_i32_0 = arith.constant 0 : i32
    %c0_i32_1 = arith.constant 0 : i32
    return %c0_i32, %c0_i32_0 : i32, i32
  }
  func.func @transform_2(%arg0: i32) -> (i32, i32, i32) {
    %c0_i32 = arith.constant 0 : i32
    %c0_i32_0 = arith.constant 0 : i32
    %c0_i32_1 = arith.constant 0 : i32
    return %arg0, %c0_i32, %c0_i32_0 : i32, i32, i32
  }
  func.func @transform_3(%arg0: i32) -> (i32, i32, i32) {
    %c0_i32 = arith.constant 0 : i32
    %c0_i32_0 = arith.constant 0 : i32
    %c0_i32_1 = arith.constant 0 : i32
    return %arg0, %c0_i32, %c0_i32_0 : i32, i32, i32
  }
  func.func @transform_4(%arg0: i32) -> (i32, i32) {
    %c0_i32 = arith.constant 0 : i32
    %c0_i32_0 = arith.constant 0 : i32
    %c0_i32_1 = arith.constant 0 : i32
    return %c0_i32, %c0_i32_0 : i32, i32
  }
  func.func @transform_5(%arg0: i32) -> (i32, i32, i32) {
    %c0_i32 = arith.constant 0 : i32
    %c0_i32_0 = arith.constant 0 : i32
    %c0_i32_1 = arith.constant 0 : i32
    return %arg0, %c0_i32, %c0_i32_0 : i32, i32, i32
  }
  func.func @transform_6(%arg0: i32) -> (i32, i32, i32) {
    %c0_i32 = arith.constant 0 : i32
    %c0_i32_0 = arith.constant 0 : i32
    %c0_i32_1 = arith.constant 0 : i32
    return %arg0, %c0_i32, %c0_i32_0 : i32, i32, i32
  }
  func.func @transform_7(%arg0: i32) -> (i32, i32, i32) {
    %c0_i32 = arith.constant 0 : i32
    %c0_i32_0 = arith.constant 0 : i32
    %c0_i32_1 = arith.constant 0 : i32
    return %arg0, %c0_i32, %c0_i32_0 : i32, i32, i32
  }
  func.func @transform_8(%arg0: i32) -> (i32, i32, i32) {
    %c0_i32 = arith.constant 0 : i32
    %c0_i32_0 = arith.constant 0 : i32
    %c0_i32_1 = arith.constant 0 : i32
    return %arg0, %c0_i32, %c0_i32_0 : i32, i32, i32
  }
}

</mosaic_0001>

<llo_original>
// kernel: tpu_custom_call.1
$region0: #{tpu_custom_call.1}
  #allocation0 [shape = 'u32[]', space=smem, size = 0x4, offset = 0x4, fixed_abs, tag = 'smem constant byte address 0x4 - core index']
  #allocation1 [shape = 'u32[72,128]{1,0:T(1,128)}', space=vmem, size = 0x9000, scoped, tag = 'internal scratch']
  %s0 = inlined_call_operand.vmem [shape: bf16[2,8,64], index: 0, kind: input, shape index: {}]
  %s1 = inlined_call_operand.vmem [shape: bf16[16,64], index: 1, kind: input, shape index: {}]
  %s2 = inlined_call_operand.vmem [shape: f32[2,4,16], index: 2, kind: input, shape index: {}]
  %s3 = inlined_call_operand.vmem [shape: f32[2,12,66], index: 3, kind: input, shape index: {}]
  %s4 = inlined_call_operand.vmem [shape: f32[16,8], index: 4, kind: input, shape index: {}]
  %s5 = inlined_call_operand.vmem [shape: f32[2,16,59], index: 5, kind: input, shape index: {}]
  %s6 = inlined_call_operand.hbm [shape: f32[2,16,66], index: 6, kind: input, shape index: {}]
  %s7 = inlined_call_operand.vmem [shape: f32[2,1,58], index: 7, kind: input, shape index: {}]
  %s8 = inlined_call_operand.vmem [shape: f32[2,1,1], index: 8, kind: output, shape index: {}]
  %s9 = sld [smem:[#allocation0]]
  $region69: #{tpu_custom_call.1} parent=0
    _
  %s11 = ssub.s32 1, %s9
  %s12 = scalar_select 0, %s11, %s9
  $region1: #{tpu_custom_call.1} parent=0
    #allocation2 [shape = 'u8[16384]{0}', space=vmem, size = 0x4000, scoped, tag = 'input window, operand 6']
    #allocation3 [shape = 's32[2]{0}', space=sflag, size = 0x8, scoped, tag = 'scoped memory for tpu_custom_call.1']
    %13 = vsyncpa [#allocation3], 0
    %s14 = scalar_lea.sflag [#allocation3], 1
    %15 = vsyncpa %s14, 0
    loop: start=0, step=1, limit=4
    $region2: #{tpu_custom_call.1} parent=1 // loop_pre_header
      _
    $region3: #{tpu_custom_call.1} parent=1 // loop_header
      %s17 = sphi 0, %s21
      %p18 = scmp.ge.s32.totalorder %s17, 4
      %s27 = sphi 0, %s29
      %s30 = sphi 0, %s27
      %s31 = sphi 0, %s30
      %s47 = sphi 0, %s31
      %s51 = sphi 0, %s51
      %s53 = sphi 0, %s51
      %s54 = sphi 0, %s53
      %s68 = sphi 0, %s54
      %s74 = sphi 0, %s76
      %s77 = sphi 0, %s74
      %s78 = sphi 0, %s77
      %s94 = sphi 0, %s78
      %s100 = sphi 0, %s102
      %s103 = sphi 0, %s100
      %s104 = sphi 0, %s103
      %s120 = sphi 0, %s104
      %s124 = sphi 0, %s124
      %s126 = sphi 0, %s124
      %s127 = sphi 0, %s126
      %s141 = sphi 0, %s127
      %s147 = sphi 0, %s149
      %s150 = sphi 0, %s147
      %s151 = sphi 0, %s150
      %s167 = sphi 0, %s151
      %s173 = sphi 0, %s175
      %s176 = sphi 0, %s173
      %s177 = sphi 0, %s176
      %s193 = sphi 0, %s177
      %s199 = sphi 0, %s201
      %s202 = sphi 0, %s199
      %s203 = sphi 0, %s202
      %s219 = sphi 0, %s203
      %s225 = sphi 0, %s227
      %s228 = sphi 0, %s225
      %s229 = sphi 0, %s228
      %s245 = sphi 0, %s229
    $region4: #{tpu_custom_call.1} parent=1 // loop_header_branch
      %20 = sbr.rel (%p18) target = $region8
    $region5: #{tpu_custom_call.1} parent=1 // loop_body
      %s22 = ssub.s32 %s17, 1
      %s23 = ssub.s32 %s17, 2
      %s24 = sadd.s32 %s17, 1
      %s25 = ssub.s32 %s17, %s24
      %p26 = scmp.eq.s32.totalorder %s25, 0
      %s28 = sadd.s32 %s27, 1
      %s29 = scalar_select %p26, %s27, %s28
      %p32 = pneg %p26
      %p33 = scmp.eq.s32.totalorder %s17, 1
      %p34 = por %p32, %p33
      %p35 = scmp.ne.s32.totalorder %s27, %s30
      %p36 = scmp.eq.s32.totalorder %s17, 0
      %p37 = por %p35, %p36
      %p38 = scmp.ne.s32.totalorder %s27, %s30
      %p39 = scmp.eq.s32.totalorder %s22, 1
      %p40 = por %p38, %p39
      %p41 = scmp.ne.s32.totalorder %s30, %s31
      %p42 = scmp.eq.s32.totalorder %s22, 0
      %p43 = por %p41, %p42
      %p44 = scmp.ne.s32.totalorder %s30, %s31
      %p45 = scmp.eq.s32.totalorder %s23, 1
      %p46 = por %p44, %p45
      %p48 = scmp.ne.s32.totalorder %s31, %s47
      %p49 = scmp.eq.s32.totalorder %s23, 0
      %p50 = por %p48, %p49
      %s52 = sadd.s32 %s51, 1
      %p55 = scmp.eq.s32.totalorder %s17, 1
      %p56 = scmp.ne.s32.totalorder %s51, %s53
      %p57 = scmp.eq.s32.totalorder %s17, 0
      %p58 = por %p56, %p57
      %p59 = scmp.ne.s32.totalorder %s51, %s53
      %p60 = scmp.eq.s32.totalorder %s22, 1
      %p61 = por %p59, %p60
      %p62 = scmp.ne.s32.totalorder %s53, %s54
      %p63 = scmp.eq.s32.totalorder %s22, 0
      %p64 = por %p62, %p63
      %p65 = scmp.ne.s32.totalorder %s53, %s54
      %p66 = scmp.eq.s32.totalorder %s23, 1
      %p67 = por %p65, %p66
      %p69 = scmp.ne.s32.totalorder %s54, %s68
      %p70 = scmp.eq.s32.totalorder %s23, 0
      %p71 = por %p69, %p70
      %s72 = ssub.s32 %s17, %s24
      %p73 = scmp.eq.s32.totalorder %s72, 0
      %s75 = sadd.s32 %s74, 1
      %s76 = scalar_select %p73, %s74, %s75
      %p79 = pneg %p73
      %p80 = scmp.eq.s32.totalorder %s17, 1
      %p81 = por %p79, %p80
      %p82 = scmp.ne.s32.totalorder %s74, %s77
      %p83 = scmp.eq.s32.totalorder %s17, 0
      %p84 = por %p82, %p83
      %p85 = scmp.ne.s32.totalorder %s74, %s77
      %p86 = scmp.eq.s32.totalorder %s22, 1
      %p87 = por %p85, %p86
      %p88 = scmp.ne.s32.totalorder %s77, %s78
      %p89 = scmp.eq.s32.totalorder %s22, 0
      %p90 = por %p88, %p89
      %p91 = scmp.ne.s32.totalorder %s77, %s78
      %p92 = scmp.eq.s32.totalorder %s23, 1
      %p93 = por %p91, %p92
      %p95 = scmp.ne.s32.totalorder %s78, %s94
      %p96 = scmp.eq.s32.totalorder %s23, 0
      %p97 = por %p95, %p96
      %s98 = ssub.s32 %s17, %s24
      %p99 = scmp.eq.s32.totalorder %s98, 0
      %s101 = sadd.s32 %s100, 1
      %s102 = scalar_select %p99, %s100, %s101
      %p105 = pneg %p99
      %p106 = scmp.eq.s32.totalorder %s17, 1
      %p107 = por %p105, %p106
      %p108 = scmp.ne.s32.totalorder %s100, %s103
      %p109 = scmp.eq.s32.totalorder %s17, 0
      %p110 = por %p108, %p109
      %p111 = scmp.ne.s32.totalorder %s100, %s103
      %p112 = scmp.eq.s32.totalorder %s22, 1
      %p113 = por %p111, %p112
      %p114 = scmp.ne.s32.totalorder %s103, %s104
      %p115 = scmp.eq.s32.totalorder %s22, 0
      %p116 = por %p114, %p115
      %p117 = scmp.ne.s32.totalorder %s103, %s104
      %p118 = scmp.eq.s32.totalorder %s23, 1
      %p119 = por %p117, %p118
      %p121 = scmp.ne.s32.totalorder %s104, %s120
      %p122 = scmp.eq.s32.totalorder %s23, 0
      %p123 = por %p121, %p122
      %s125 = sadd.s32 %s124, 1
      %p128 = scmp.eq.s32.totalorder %s17, 1
      %p129 = scmp.ne.s32.totalorder %s124, %s126
      %p130 = scmp.eq.s32.totalorder %s17, 0
      %p131 = por %p129, %p130
      %p132 = scmp.ne.s32.totalorder %s124, %s126
      %p133 = scmp.eq.s32.totalorder %s22, 1
      %p134 = por %p132, %p133
      %p135 = scmp.ne.s32.totalorder %s126, %s127
      %p136 = scmp.eq.s32.totalorder %s22, 0
      %p137 = por %p135, %p136
      %p138 = scmp.ne.s32.totalorder %s126, %s127
      %p139 = scmp.eq.s32.totalorder %s23, 1
      %p140 = por %p138, %p139
      %p142 = scmp.ne.s32.totalorder %s127, %s141
      %p143 = scmp.eq.s32.totalorder %s23, 0
      %p144 = por %p142, %p143
      %s145 = ssub.s32 %s17, %s24
      %p146 = scmp.eq.s32.totalorder %s145, 0
      %s148 = sadd.s32 %s147, 1
      %s149 = scalar_select %p146, %s147, %s148
      %p152 = pneg %p146
      %p153 = scmp.eq.s32.totalorder %s17, 1
      %p154 = por %p152, %p153
      %p155 = scmp.ne.s32.totalorder %s147, %s150
      %p156 = scmp.eq.s32.totalorder %s17, 0
      %p157 = por %p155, %p156
      %p158 = scmp.ne.s32.totalorder %s147, %s150
      %p159 = scmp.eq.s32.totalorder %s22, 1
      %p160 = por %p158, %p159
      %p161 = scmp.ne.s32.totalorder %s150, %s151
      %p162 = scmp.eq.s32.totalorder %s22, 0
      %p163 = por %p161, %p162
      %p164 = scmp.ne.s32.totalorder %s150, %s151
      %p165 = scmp.eq.s32.totalorder %s23, 1
      %p166 = por %p164, %p165
      %p168 = scmp.ne.s32.totalorder %s151, %s167
      %p169 = scmp.eq.s32.totalorder %s23, 0
      %p170 = por %p168, %p169
      %s171 = ssub.s32 %s17, %s24
      %p172 = scmp.eq.s32.totalorder %s171, 0
      %s174 = sadd.s32 %s173, 1
      %s175 = scalar_select %p172, %s173, %s174
      %p178 = pneg %p172
      %p179 = scmp.eq.s32.totalorder %s17, 1
      %p180 = por %p178, %p179
      %p181 = scmp.ne.s32.totalorder %s173, %s176
      %p182 = scmp.eq.s32.totalorder %s17, 0
      %p183 = por %p181, %p182
      %p184 = scmp.ne.s32.totalorder %s173, %s176
      %p185 = scmp.eq.s32.totalorder %s22, 1
      %p186 = por %p184, %p185
      %p187 = scmp.ne.s32.totalorder %s176, %s177
      %p188 = scmp.eq.s32.totalorder %s22, 0
      %p189 = por %p187, %p188
      %p190 = scmp.ne.s32.totalorder %s176, %s177
      %p191 = scmp.eq.s32.totalorder %s23, 1
      %p192 = por %p190, %p191
      %p194 = scmp.ne.s32.totalorder %s177, %s193
      %p195 = scmp.eq.s32.totalorder %s23, 0
      %p196 = por %p194, %p195
      %s197 = ssub.s32 %s17, %s24
      %p198 = scmp.eq.s32.totalorder %s197, 0
      %s200 = sadd.s32 %s199, 1
      %s201 = scalar_select %p198, %s199, %s200
      %p204 = pneg %p198
      %p205 = scmp.eq.s32.totalorder %s17, 1
      %p206 = por %p204, %p205
      %p207 = scmp.ne.s32.totalorder %s199, %s202
      %p208 = scmp.eq.s32.totalorder %s17, 0
      %p209 = por %p207, %p208
      %p210 = scmp.ne.s32.totalorder %s199, %s202
      %p211 = scmp.eq.s32.totalorder %s22, 1
      %p212 = por %p210, %p211
      %p213 = scmp.ne.s32.totalorder %s202, %s203
      %p214 = scmp.eq.s32.totalorder %s22, 0
      %p215 = por %p213, %p214
      %p216 = scmp.ne.s32.totalorder %s202, %s203
      %p217 = scmp.eq.s32.totalorder %s23, 1
      %p218 = por %p216, %p217
      %p220 = scmp.ne.s32.totalorder %s203, %s219
      %p221 = scmp.eq.s32.totalorder %s23, 0
      %p222 = por %p220, %p221
      %s223 = ssub.s32 %s17, %s24
      %p224 = scmp.eq.s32.totalorder %s223, 0
      %s226 = sadd.s32 %s225, 1
      %s227 = scalar_select %p224, %s225, %s226
      %p230 = pneg %p224
      %p231 = scmp.eq.s32.totalorder %s17, 1
      %p232 = por %p230, %p231
      %p233 = scmp.ne.s32.totalorder %s225, %s228
      %p234 = scmp.eq.s32.totalorder %s17, 0
      %p235 = por %p233, %p234
      %p236 = scmp.ne.s32.totalorder %s225, %s228
      %p237 = scmp.eq.s32.totalorder %s22, 1
      %p238 = por %p236, %p237
      %p239 = scmp.ne.s32.totalorder %s228, %s229
      %p240 = scmp.eq.s32.totalorder %s22, 0
      %p241 = por %p239, %p240
      %p242 = scmp.ne.s32.totalorder %s228, %s229
      %p243 = scmp.eq.s32.totalorder %s23, 1
      %p244 = por %p242, %p243
      %p246 = scmp.ne.s32.totalorder %s229, %s245
      %p247 = scmp.eq.s32.totalorder %s23, 0
      %p248 = por %p246, %p247
      %p249 = scmp.le.s32.totalorder 1, %s17
      %p250 = scmp.lt.s32.totalorder %s17, 3
      %p251 = pnand %p249, %p250
      %p252 = pneg %p251
      // Predicated region
      $region9: #{tpu_custom_call.1} parent=5 // pred_check
        _
      $region10: #{tpu_custom_call.1} parent=5 // pred_check_branch
        %254 = sbr.rel (%p251) target = $region12
      $region11: #{tpu_custom_call.1} parent=5 // pred_region
        %s255 = ssub.s32 %s17, 1
        // Predicated region
        $region13: #{tpu_custom_call.1} parent=11 // pred_check
          %p256 = pneg %p64
        $region14: #{tpu_custom_call.1} parent=11 // pred_check_branch
          %258 = sbr.rel (%p256) target = $region16
        $region15: #{tpu_custom_call.1} parent=11 // pred_region
          _
        $region16: #{tpu_custom_call.1} parent=11 // pred_fallthru
          _
        // Predicated region
        $region17: #{tpu_custom_call.1} parent=11 // pred_check
          %p259 = pneg %p137
        $region18: #{tpu_custom_call.1} parent=11 // pred_check_branch
          %261 = sbr.rel (%p259) target = $region20
        $region19: #{tpu_custom_call.1} parent=11 // pred_region
          _
        $region20: #{tpu_custom_call.1} parent=11 // pred_fallthru
          _
      $region12: #{tpu_custom_call.1} parent=5 // pred_fallthru
        _
      %p262 = scmp.lt.s32.totalorder %s17, 2
      // Predicated region
      $region21: #{tpu_custom_call.1} parent=5 // pred_check
        %p263 = pneg %p262
      $region22: #{tpu_custom_call.1} parent=5 // pred_check_branch
        %265 = sbr.rel (%p263) target = $region24
      $region23: #{tpu_custom_call.1} parent=5 // pred_region
        // Predicated region
        $region25: #{tpu_custom_call.1} parent=23 // pred_check
          %p266 = pneg %p37
        $region26: #{tpu_custom_call.1} parent=23 // pred_check_branch
          %268 = sbr.rel (%p266) target = $region28
        $region27: #{tpu_custom_call.1} parent=23 // pred_region
          %p269 = scmp.lt.s32.totalorder %s17, 1
          %s270 = scalar_select %p269, %s17, 1
          %s271 = smul.addr %s270, 4
          %s272 = scalar_lea.vmem %s0, %s271
        $region28: #{tpu_custom_call.1} parent=23 // pred_fallthru
          _
        // Predicated region
        $region29: #{tpu_custom_call.1} parent=23 // pred_check
          %p273 = pneg %p84
        $region30: #{tpu_custom_call.1} parent=23 // pred_check_branch
          %275 = sbr.rel (%p273) target = $region32
        $region31: #{tpu_custom_call.1} parent=23 // pred_region
          %p276 = scmp.lt.s32.totalorder %s17, 1
          %s277 = scalar_select %p276, %s17, 1
          %s278 = smul.addr %s277, 4
          %s279 = scalar_lea.vmem %s2, %s278
        $region32: #{tpu_custom_call.1} parent=23 // pred_fallthru
          _
        // Predicated region
        $region33: #{tpu_custom_call.1} parent=23 // pred_check
          %p280 = pneg %p110
        $region34: #{tpu_custom_call.1} parent=23 // pred_check_branch
          %282 = sbr.rel (%p280) target = $region36
        $region35: #{tpu_custom_call.1} parent=23 // pred_region
          %p283 = scmp.lt.s32.totalorder %s17, 1
          %s284 = scalar_select %p283, %s17, 1
          %s285 = smul.addr %s284, 2
          %s286 = smul.addr %s285, 8
          %s287 = scalar_lea.vmem %s3, %s286
        $region36: #{tpu_custom_call.1} parent=23 // pred_fallthru
          _
        // Predicated region
        $region37: #{tpu_custom_call.1} parent=23 // pred_check
          %p288 = pneg %p157
        $region38: #{tpu_custom_call.1} parent=23 // pred_check_branch
          %290 = sbr.rel (%p288) target = $region40
        $region39: #{tpu_custom_call.1} parent=23 // pred_region
          %p291 = scmp.lt.s32.totalorder %s17, 1
          %s292 = scalar_select %p291, %s17, 1
          %s293 = smul.addr %s292, 2
          %s294 = smul.addr %s293, 8
          %s295 = scalar_lea.vmem %s5, %s294
        $region40: #{tpu_custom_call.1} parent=23 // pred_fallthru
          _
        // Predicated region
        $region41: #{tpu_custom_call.1} parent=23 // pred_check
          %p296 = pneg %p183
        $region42: #{tpu_custom_call.1} parent=23 // pred_check_branch
          %298 = sbr.rel (%p296) target = $region44
        $region43: #{tpu_custom_call.1} parent=23 // pred_region
          %s299 = sand.u32 %s173, 1
          %s300 = scalar_lea.sflag [#allocation3], %s299
          %s301 = sand.u32 %s173, 1
          %s302 = smul.addr %s301, 16
          %s303 = scalar_lea.vmem [#allocation2], %s302
          %305 = vsyncadd %s300, 0
          %s306 = smul.addr %s17, 2
          %s307 = smul.addr %s306, 8
          %s308 = scalar_lea.hbm %s6, %s307
          %s309 = sshll.u32 %s308, 4
          %s310 = int_to_ptr.hbm [resolvable:$true] %s309
          %s311 = sshll.u32 %s303, 4
          %s312 = int_to_ptr.vmem [resolvable:$true] %s311
          %317 = dma.hbm_to_vmem [thread:$0]  %s310, 256, %s312, %s300, 128, 128, 8
        $region44: #{tpu_custom_call.1} parent=23 // pred_fallthru
          _
        // Predicated region
        $region45: #{tpu_custom_call.1} parent=23 // pred_check
          %p318 = pneg %p209
        $region46: #{tpu_custom_call.1} parent=23 // pred_check_branch
          %320 = sbr.rel (%p318) target = $region48
        $region47: #{tpu_custom_call.1} parent=23 // pred_region
          %p321 = scmp.lt.s32.totalorder %s17, 1
          %s322 = scalar_select %p321, %s17, 1
          %s323 = scalar_lea.vmem %s7, %s322
        $region48: #{tpu_custom_call.1} parent=23 // pred_fallthru
          _
      $region24: #{tpu_custom_call.1} parent=5 // pred_fallthru
        _
      %p324 = scmp.le.s32.totalorder 1, %s17
      %p325 = scmp.lt.s32.totalorder %s17, 3
      %p326 = pnand %p324, %p325
      %p327 = pneg %p326
      // Predicated region
      $region49: #{tpu_custom_call.1} parent=5 // pred_check
        _
      $region50: #{tpu_custom_call.1} parent=5 // pred_check_branch
        %329 = sbr.rel (%p326) target = $region52
      $region51: #{tpu_custom_call.1} parent=5 // pred_region
        %s330 = ssub.s32 %s17, 1
        %s331 = sand.u32 %s176, 1
        %s332 = scalar_lea.sflag [#allocation3], %s331
        %s333 = sand.u32 %s176, 1
        %s334 = smul.addr %s333, 16
        %s335 = scalar_lea.vmem [#allocation2], %s334
        // Predicated region
        $region53: #{tpu_custom_call.1} parent=51 // pred_check
          %p336 = pneg %p189
        $region54: #{tpu_custom_call.1} parent=51 // pred_check_branch
          %338 = sbr.rel (%p336) target = $region56
        $region55: #{tpu_custom_call.1} parent=51 // pred_region
          %340 = dma.done %s332, 256
        $region56: #{tpu_custom_call.1} parent=51 // pred_fallthru
          _
        %p341 = scmp.lt.s32.totalorder %s22, 1
        %s342 = scalar_select %p341, %s22, 1
        %s343 = smul.addr %s342, 4
        %s344 = scalar_lea.vmem %s0, %s343
        %p345 = pneg %p43
        %p346 = pneg %p40
        %p347 = pneg %p64
        %p348 = pneg %p61
        %p349 = scmp.lt.s32.totalorder %s22, 1
        %s350 = scalar_select %p349, %s22, 1
        %s351 = smul.addr %s350, 4
        %s352 = scalar_lea.vmem %s2, %s351
        %p353 = pneg %p90
        %p354 = pneg %p87
        %p355 = scmp.lt.s32.totalorder %s22, 1
        %s356 = scalar_select %p355, %s22, 1
        %s357 = smul.addr %s356, 2
        %s358 = smul.addr %s357, 8
        %s359 = scalar_lea.vmem %s3, %s358
        %p360 = pneg %p116
        %p361 = pneg %p113
        %p362 = pneg %p137
        %p363 = pneg %p134
        %p364 = scmp.lt.s32.totalorder %s22, 1
        %s365 = scalar_select %p364, %s22, 1
        %s366 = smul.addr %s365, 2
        %s367 = smul.addr %s366, 8
        %s368 = scalar_lea.vmem %s5, %s367
        %p369 = pneg %p163
        %p370 = pneg %p160
        %s371 = sand.u32 %s176, 1
        %s372 = scalar_lea.sflag [#allocation3], %s371
        %s373 = sand.u32 %s176, 1
        %s374 = smul.addr %s373, 16
        %s375 = scalar_lea.vmem [#allocation2], %s374
        %p376 = pneg %p189
        %p377 = pneg %p186
        %p378 = scmp.lt.s32.totalorder %s22, 1
        %s379 = scalar_select %p378, %s22, 1
        %s380 = scalar_lea.vmem %s7, %s379
        %p381 = pneg %p215
        %p382 = pneg %p212
        %p383 = pneg %p241
        %p384 = pneg %p238
        %p385 = scmp.lt.s32.totalorder %s22, 1
        %s386 = scalar_select %p385, %s22, 1
        %s387 = scalar_lea.vmem %s8, %s386
        %p388 = scmp.lt.s32.totalorder %s22, 1
        %s389 = scalar_select %p388, %s22, 1
        %s390 = smul.addr %s389, 4
        %s391 = scalar_lea.vmem %s0, %s390
        %p392 = scmp.lt.s32.totalorder %s22, 1
        %s393 = scalar_select %p392, %s22, 1
        %s394 = smul.addr %s393, 4
        %s395 = scalar_lea.vmem %s2, %s394
        %p396 = scmp.lt.s32.totalorder %s22, 1
        %s397 = scalar_select %p396, %s22, 1
        %s398 = smul.addr %s397, 2
        %s399 = smul.addr %s398, 8
        %s400 = scalar_lea.vmem %s3, %s399
        %p401 = scmp.lt.s32.totalorder %s22, 1
        %s402 = scalar_select %p401, %s22, 1
        %s403 = smul.addr %s402, 2
        %s404 = smul.addr %s403, 8
        %s405 = scalar_lea.vmem %s5, %s404
        %p406 = scmp.lt.s32.totalorder %s22, 1
        %s407 = scalar_select %p406, %s22, 1
        %s408 = scalar_lea.vmem %s7, %s407
        %p409 = scmp.lt.s32.totalorder %s22, 1
        %s410 = scalar_select %p409, %s22, 1
        %s411 = scalar_lea.vmem %s8, %s410
        %v413 = vld [vmem:[%s391] sm:$0xf]
        %v414 = vld [vmem:[%s1] sm:$0xf]
        %v415 = vld [vmem:[%s1 + $0x4] sm:$0xf]
        %v418 = vunpack.c.l.b16 %v414
        %v419 = vunpack.c.l.b16 %v415
        %v420 = vpack.c.b16 %v419, %v418
        %vm421 = vcmask 523264
        %v423 = vsel %vm421, %v420, 0
        %v426 = vsel %vm421, %v413, 0
        %428 = vmatpush.bf16.xpose.msra.mxu0 0
        %429 = vmatpush.bf16.xpose.msra.mxu0 0
        %430 = vmatpush.bf16.xpose.msra.mxu0 0
        %431 = vmatpush.bf16.xpose.msra.mxu0 0
        %432 = vmatpush.bf16.xpose.msra.mxu0 0
        %433 = vmatpush.bf16.xpose.msra.mxu0 0
        %434 = vmatpush.bf16.xpose.msra.mxu0 0
        %435 = vmatpush.bf16.xpose.msra.mxu0 %v426
        %436 = vmatmul.bf16.gmra.mxu0 %v423
        %v437 = vpop.f32.mrf.mxu0
        %v438 = vadd.f32 0.0, %v437
        %v439 = vpop.f32.mrf.mxu0
        %v440 = vadd.f32 0.0, %v439
        %441 = vdwg.mxu0
        %v442 = vld [vmem:[%s395] sm:$0xf]
        %v443 = vld [vmem:[%s400] sm:$0xff]
        %v444 = vld [vmem:[%s400 + $0x8] sm:$0xf]
        %vm447 = vcmask 1043456
        %v448 = vrot.slane %v443, 4
        %v449 = vrot.slane %v444, 4
        %v450 = vsel %vm447, %v448, %v449
        %vm452 = vcmask 64512
        %v454 = vsel %vm452, %v438, 0
        %v457 = vsel %vm452, %v440, 0
        %459 = vmatpush.msra.mxu0 0.0
        %460 = vmatpush.msra.mxu0 0.0
        %461 = vmatpush.msra.mxu0 0.0
        %462 = vmatpush.msra.mxu0 0.0
        %463 = vmatpush.msra.mxu0 0.0
        %464 = vmatpush.msra.mxu0 0.0
        %465 = vmatpush.msra.mxu0 0.0
        %466 = vmatpush.msra.mxu0 0.0
        %467 = vmatpush.msra.mxu0 0.0
        %468 = vmatpush.msra.mxu0 0.0
        %469 = vmatpush.msra.mxu0 0.0
        %470 = vmatpush.msra.mxu0 0.0
        %471 = vmatpush.msra.mxu0 0.0
        %472 = vmatpush.msra.mxu0 0.0
        %473 = vmatpush.msra.mxu0 0.0
        %474 = vmatpush.msra.mxu0 %v450
        %475 = vmatmul.f32.gmra.mxu0 %v454
        %v476 = vpop.f32.mrf.mxu0
        %v477 = vadd.f32 0.0, %v476
        %478 = vmatmul.f32.gmra.mxu0 %v457
        %v479 = vpop.f32.mrf.mxu0
        %v480 = vadd.f32 0.0, %v479
        %481 = vdwg.mxu0
        %482 = vxpose.xlu0.b32.start [1/16] %v442, 128
        %483 = vxpose.xlu0.b32.cont [2/16] 0.0, 128
        %484 = vxpose.xlu0.b32.cont [3/16] 0.0, 128
        %485 = vxpose.xlu0.b32.cont [4/16] 0.0, 128
        %486 = vxpose.xlu0.b32.cont [5/16] 0.0, 128
        %487 = vxpose.xlu0.b32.cont [6/16] 0.0, 128
        %488 = vxpose.xlu0.b32.cont [7/16] 0.0, 128
        %489 = vxpose.xlu0.b32.cont [8/16] 0.0, 128
        %490 = vxpose.xlu0.b32.cont [9/16] 0.0, 128
        %491 = vxpose.xlu0.b32.cont [10/16] 0.0, 128
        %492 = vxpose.xlu0.b32.cont [11/16] 0.0, 128
        %493 = vxpose.xlu0.b32.cont [12/16] 0.0, 128
        %494 = vxpose.xlu0.b32.cont [13/16] 0.0, 128
        %495 = vxpose.xlu0.b32.cont [14/16] 0.0, 128
        %496 = vxpose.xlu0.b32.cont [15/16] 0.0, 128
        %497 = vxpose.xlu0.b32.end [16/16] 0.0, 128
        %v498 = vpop.trf.xlu0
        %v499 = vpop.trf.xlu0
        %v500 = vpop.trf.xlu0
        %v501 = vpop.trf.xlu0
        %v502 = vpop.trf.xlu0
        %v503 = vpop.trf.xlu0
        %v504 = vpop.trf.xlu0
        %v505 = vpop.trf.xlu0
        %v506 = vpop.trf.xlu0
        %v507 = vpop.trf.xlu0
        %v508 = vpop.trf.xlu0
        %v509 = vpop.trf.xlu0
        %v510 = vpop.trf.xlu0
        %v511 = vpop.trf.xlu0
        %v512 = vpop.trf.xlu0
        %v513 = vpop.trf.xlu0
        %vm514 = vcmask 31744
        %v516 = vsel %vm514, %v498, 0
        %v519 = vsel %vm514, %v499, 0
        %v521 = vsel %vm447, %v443, 0
        %523 = vmatpush.msra.mxu0 0.0
        %524 = vmatpush.msra.mxu0 0.0
        %525 = vmatpush.msra.mxu0 0.0
        %526 = vmatpush.msra.mxu0 0.0
        %527 = vmatpush.msra.mxu0 0.0
        %528 = vmatpush.msra.mxu0 0.0
        %529 = vmatpush.msra.mxu0 0.0
        %530 = vmatpush.msra.mxu0 0.0
        %531 = vmatpush.msra.mxu0 0.0
        %532 = vmatpush.msra.mxu0 0.0
        %533 = vmatpush.msra.mxu0 0.0
        %534 = vmatpush.msra.mxu0 0.0
        %535 = vmatpush.msra.mxu0 0.0
        %536 = vmatpush.msra.mxu0 0.0
        %537 = vmatpush.msra.mxu0 0.0
        %538 = vmatpush.msra.mxu0 %v521
        %539 = vmatmul.f32.gmra.mxu0 %v516
        %v540 = vpop.f32.mrf.mxu0
        %v541 = vadd.f32 %v477, %v540
        %542 = vmatmul.f32.gmra.mxu0 %v519
        %v543 = vpop.f32.mrf.mxu0
        %v544 = vadd.f32 %v480, %v543
        %545 = vdwg.mxu0
        %v546 = vld [vmem:[%s4] sm:$0xff]
        %v547 = vld [vmem:[%s4 + $0x8] sm:$0xff]
        %v548 = vld [vmem:[%s405] sm:$0xff]
        %v549 = vld [vmem:[%s405 + $0x8] sm:$0xff]
        %551 = vset.pattern.permute.xlu0 0
        %552 = vperm.xlu0 %551, %v546
        %v553 = vpop.permute.xlu0 %552
        %556 = vset.pattern.permute.xlu0 0
        %557 = vperm.xlu0 %556, %v547
        %v558 = vpop.permute.xlu0 %557
        %v560 = vmul.f32 %v541, %v553
        %v561 = vmul.f32 %v544, %v558
        %v562 = vadd.f32 %v548, %v560
        %v563 = vadd.f32 %v549, %v561
        %564 = vset.pattern.permute.xlu0 1
        %565 = vperm.xlu0 %564, %v546
        %v566 = vpop.permute.xlu0 %565
        %568 = vset.pattern.permute.xlu0 1
        %569 = vperm.xlu0 %568, %v547
        %v570 = vpop.permute.xlu0 %569
        %v572 = vmul.f32 %v541, %v566
        %v573 = vmul.f32 %v544, %v570
        %576 = vrot.lane.b32.xlu0 %v572, 127
        %v577 = vpop.permute.xlu0 %576
        %578 = vrot.lane.b32.xlu0 %v573, 127
        %v579 = vpop.permute.xlu0 %578
        %v582 = vadd.f32 %v562, %v577
        %v583 = vadd.f32 %v563, %v579
        %584 = vset.pattern.permute.xlu0 2
        %585 = vperm.xlu0 %584, %v546
        %v586 = vpop.permute.xlu0 %585
        %588 = vset.pattern.permute.xlu0 2
        %589 = vperm.xlu0 %588, %v547
        %v590 = vpop.permute.xlu0 %589
        %v592 = vmul.f32 %v541, %v586
        %v593 = vmul.f32 %v544, %v590
        %596 = vrot.lane.b32.xlu0 %v592, 126
        %v597 = vpop.permute.xlu0 %596
        %598 = vrot.lane.b32.xlu0 %v593, 126
        %v599 = vpop.permute.xlu0 %598
        %v602 = vadd.f32 %v582, %v597
        %v603 = vadd.f32 %v583, %v599
        %604 = vset.pattern.permute.xlu0 3
        %605 = vperm.xlu0 %604, %v546
        %v606 = vpop.permute.xlu0 %605
        %608 = vset.pattern.permute.xlu0 3
        %609 = vperm.xlu0 %608, %v547
        %v610 = vpop.permute.xlu0 %609
        %v612 = vmul.f32 %v541, %v606
        %v613 = vmul.f32 %v544, %v610
        %616 = vrot.lane.b32.xlu0 %v612, 125
        %v617 = vpop.permute.xlu0 %616
        %618 = vrot.lane.b32.xlu0 %v613, 125
        %v619 = vpop.permute.xlu0 %618
        %v622 = vadd.f32 %v602, %v617
        %v623 = vadd.f32 %v603, %v619
        %624 = vset.pattern.permute.xlu0 4
        %625 = vperm.xlu0 %624, %v546
        %v626 = vpop.permute.xlu0 %625
        %628 = vset.pattern.permute.xlu0 4
        %629 = vperm.xlu0 %628, %v547
        %v630 = vpop.permute.xlu0 %629
        %v632 = vmul.f32 %v541, %v626
        %v633 = vmul.f32 %v544, %v630
        %636 = vrot.lane.b32.xlu0 %v632, 124
        %v637 = vpop.permute.xlu0 %636
        %638 = vrot.lane.b32.xlu0 %v633, 124
        %v639 = vpop.permute.xlu0 %638
        %v642 = vadd.f32 %v622, %v637
        %v643 = vadd.f32 %v623, %v639
        %644 = vset.pattern.permute.xlu0 5
        %645 = vperm.xlu0 %644, %v546
        %v646 = vpop.permute.xlu0 %645
        %648 = vset.pattern.permute.xlu0 5
        %649 = vperm.xlu0 %648, %v547
        %v650 = vpop.permute.xlu0 %649
        %v652 = vmul.f32 %v541, %v646
        %v653 = vmul.f32 %v544, %v650
        %656 = vrot.lane.b32.xlu0 %v652, 123
        %v657 = vpop.permute.xlu0 %656
        %658 = vrot.lane.b32.xlu0 %v653, 123
        %v659 = vpop.permute.xlu0 %658
        %v662 = vadd.f32 %v642, %v657
        %v663 = vadd.f32 %v643, %v659
        %664 = vset.pattern.permute.xlu0 6
        %665 = vperm.xlu0 %664, %v546
        %v666 = vpop.permute.xlu0 %665
        %668 = vset.pattern.permute.xlu0 6
        %669 = vperm.xlu0 %668, %v547
        %v670 = vpop.permute.xlu0 %669
        %v672 = vmul.f32 %v541, %v666
        %v673 = vmul.f32 %v544, %v670
        %676 = vrot.lane.b32.xlu0 %v672, 122
        %v677 = vpop.permute.xlu0 %676
        %678 = vrot.lane.b32.xlu0 %v673, 122
        %v679 = vpop.permute.xlu0 %678
        %v682 = vadd.f32 %v662, %v677
        %v683 = vadd.f32 %v663, %v679
        %684 = vset.pattern.permute.xlu0 7
        %685 = vperm.xlu0 %684, %v546
        %v686 = vpop.permute.xlu0 %685
        %688 = vset.pattern.permute.xlu0 7
        %689 = vperm.xlu0 %688, %v547
        %v690 = vpop.permute.xlu0 %689
        %v692 = vmul.f32 %v541, %v686
        %v693 = vmul.f32 %v544, %v690
        %696 = vrot.lane.b32.xlu0 %v692, 121
        %v697 = vpop.permute.xlu0 %696
        %698 = vrot.lane.b32.xlu0 %v693, 121
        %v699 = vpop.permute.xlu0 %698
        %v702 = vadd.f32 %v682, %v697
        %v703 = vadd.f32 %v683, %v699
        %v704 = vld [vmem:[%s335] sm:$0xff]
        %v705 = vld [vmem:[%s335 + $0x8] sm:$0xff]
        %v706 = vmul.f32 %v702, 1.442695
        %v707 = vpow.pop %v706
        %v708 = vmul.f32 %v703, 1.442695
        %v709 = vpow.pop %v708
        %712 = vrot.lane.b32.xlu0 %v702, 8
        %v713 = vpop.permute.xlu0 %712
        %714 = vrot.lane.b32.xlu0 %v703, 8
        %v715 = vpop.permute.xlu0 %714
        %v718 = vmul.f32 %v704, %v713
        %v719 = vmul.f32 %v705, %v715
        %722 = vrot.lane.b32.xlu0 %v718, 120
        %v723 = vpop.permute.xlu0 %722
        %724 = vrot.lane.b32.xlu0 %v719, 120
        %v725 = vpop.permute.xlu0 %724
        %v728 = vsub.f32 %v707, %v723
        %v729 = vsub.f32 %v709, %v725
        %v730 = vld [vmem:[%s408] sm:$0x1]
        %v732 = vperm.slane %v730, 0
        %v734 = vmul.f32 %v728, %v732
        %v735 = vmul.f32 %v729, %v732
        %vm736 = vcmask 474112
        %v737 = vsel %vm736, %v734, 0.0
        %v738 = vsel %vm736, %v735, 0.0
        %v739 = vadd.f32 %v737, %v738
        %740 = vadd.xlane.f32.xlu0 %v739
        %v741 = vpop.xlane.xlu0 %740
        %v742 = vrot.slane %v741, 4
        %v743 = vadd.f32 %v741, %v742
        %v744 = vrot.slane %v743, 2
        %v745 = vadd.f32 %v743, %v744
        %v746 = vrot.slane %v745, 1
        %v747 = vadd.f32 %v745, %v746
        %s748 = vtos %v747
        %v749 = vstv %s748
        %v750 = vmul.f32 %v749, 0.53333336
        %vm751 = vcmask 0
        %752 = vst.msk [vmem:[%s411] sm:$0x1] %vm751, %v750
        %p753 = scmp.lt.s32.totalorder %s22, 1
        %s754 = scalar_select %p753, %s22, 1
        %s755 = scalar_lea.vmem %s8, %s754
        // Predicated region
        $region57: #{tpu_custom_call.1} parent=51 // pred_check
          %p756 = pneg %p238
        $region58: #{tpu_custom_call.1} parent=51 // pred_check_branch
          %758 = sbr.rel (%p756) target = $region60
        $region59: #{tpu_custom_call.1} parent=51 // pred_region
          _
        $region60: #{tpu_custom_call.1} parent=51 // pred_fallthru
          _
      $region52: #{tpu_custom_call.1} parent=5 // pred_fallthru
        _
      %p759 = scmp.le.s32.totalorder 2, %s17
      // Predicated region
      $region61: #{tpu_custom_call.1} parent=5 // pred_check
        %p760 = pneg %p759
      $region62: #{tpu_custom_call.1} parent=5 // pred_check_branch
        %762 = sbr.rel (%p760) target = $region64
      $region63: #{tpu_custom_call.1} parent=5 // pred_region
        %s763 = ssub.s32 %s17, 2
        // Predicated region
        $region65: #{tpu_custom_call.1} parent=63 // pred_check
          %p764 = pneg %p244
        $region66: #{tpu_custom_call.1} parent=63 // pred_check_branch
          %766 = sbr.rel (%p764) target = $region68
        $region67: #{tpu_custom_call.1} parent=63 // pred_region
          %p767 = scmp.lt.s32.totalorder %s23, 1
          %s768 = scalar_select %p767, %s23, 1
          %s769 = scalar_lea.vmem %s8, %s768
        $region68: #{tpu_custom_call.1} parent=63 // pred_fallthru
          _
      $region64: #{tpu_custom_call.1} parent=5 // pred_fallthru
        _
    $region6: #{tpu_custom_call.1} parent=1 // loop_footer
      %s21 = sadd.s32 1, %s17
    $region7: #{tpu_custom_call.1} parent=1 // loop_footer_branch
      %16 = sbr.rel target = $region3
    $region8: #{tpu_custom_call.1} parent=1 // loop_exit
      _
    %770 = vsyncpa [#allocation3], 1
    %s771 = scalar_lea.sflag [#allocation3], 1
    %772 = vsyncpa %s771, 1

</llo_original>
